<compile_context>
chip_gen: v6e
topology: v6e:2x2x1
jax: 0.10.0
libtpu: 0.0.40
codegen_flags: <defaults>
</compile_context>

<pallas_src>
import functools

import jax
import jax.numpy as jnp
from jax.experimental import pallas as pl
from jax.experimental.pallas import tpu as pltpu

BN_EPS = 1e-5
_VMEM_LIMIT = 32 * 1024 * 1024  # safe scoped-VMEM budget on v5e/v6e/v7x


# ---------------------------------------------------------------------------
# Pass 1: conv matmul (transposed layout) + per-channel sum / sum-of-squares
# ---------------------------------------------------------------------------
def _conv_stats_kernel(xt_ref, wt_ref, y_ref, sum_ref, sumsq_ref):
    # xt_ref:    (K, TM)     im2col patches (transposed); TM output pixels on lanes
    # wt_ref:    (Cout, K)   conv weight, resident across the M grid axis
    # y_ref:     (Cout, TM)  raw conv output tile (f32), streamed back to HBM
    # sum_ref:   (Cout, 1)   resident accumulator: sum_m y
    # sumsq_ref: (Cout, 1)   resident accumulator: sum_m y*y
    @pl.when(pl.program_id(0) == 0)
    def _init():
        sum_ref[...] = jnp.zeros_like(sum_ref)
        sumsq_ref[...] = jnp.zeros_like(sumsq_ref)

    y = jnp.dot(wt_ref[...], xt_ref[...], preferred_element_type=jnp.float32)
    y_ref[...] = y
    sum_ref[...] += jnp.sum(y, axis=1, keepdims=True)
    sumsq_ref[...] += jnp.sum(y * y, axis=1, keepdims=True)


# ---------------------------------------------------------------------------
# Pass 2: fused BN affine (single scale/shift) + ReLU, parallel over M tiles
# ---------------------------------------------------------------------------
def _bn_relu_kernel(y_ref, scale_ref, shift_ref, o_ref):
    o_ref[...] = jnp.maximum(
        y_ref[...] * scale_ref[...] + shift_ref[...], 0.0
    ).astype(o_ref.dtype)


# ---------------------------------------------------------------------------
# Glue: transposed im2col (pure layout shuffling; compute stays in the kernels)
# ---------------------------------------------------------------------------
def _im2col_t(x, k, stride, pad):
    # x: (N, Cin, H, W) -> (Cin*k*k, N*Ho*Wo); K ordering (Cin, kh, kw) matches
    # conv_w.reshape(Cout, Cin*k*k); M ordering is (n, ho, wo).
    n, c, h, w = x.shape
    xp = jnp.pad(x, ((0, 0), (0, 0), (pad, pad), (pad, pad)))
    ho = (h + 2 * pad - k) // stride + 1
    wo = (w + 2 * pad - k) // stride + 1
    cols = []
    for i in range(k):
        for j in range(k):
            cols.append(xp[:, :, i:i + stride * ho:stride, j:j + stride * wo:stride])
    col = jnp.stack(cols, axis=2)                       # (N, Cin, k*k, Ho, Wo)
    col = col.reshape(n, c * k * k, ho * wo)            # (N, K, Ho*Wo)
    col = col.transpose(1, 0, 2).reshape(c * k * k, n * ho * wo)   # (K, M)
    return col, ho, wo


# ---------------------------------------------------------------------------
# Wrapper: conv2DBatchNormRelu forward
# ---------------------------------------------------------------------------
@functools.partial(jax.jit,
                   static_argnames=("k_size", "stride", "padding", "block_m"))
def conv2d_batchnorm_relu(x, conv_w, conv_b, bn_gamma, bn_beta,
                          *, k_size, stride, padding, block_m=256):
    # Training-mode BN subtracts the per-channel batch mean, so a per-channel
    # conv bias cancels exactly -> dropped from the hot path.
    del conv_b
    assert block_m % 128 == 0, "block_m must be a multiple of 128 (lane dim)"

    n, c_in, _, _ = x.shape
    c_out = conv_w.shape[0]

    # TODO(synk): fold the im2col into the kernel (k*k accumulated matmuls over
    # shifted NHWC slabs driven by index_maps) to cut HBM read traffic ~k*k-fold.
    xt_col, ho, wo = _im2col_t(x, k_size, stride, padding)        # (K, M)
    k_dim, m_rows = xt_col.shape

    # Pad M to a multiple of the tile; padded columns are zero so they add 0 to
    # sum/sumsq and are sliced off at the end.
    num_tiles = pl.cdiv(m_rows, block_m)
    m_pad = num_tiles * block_m
    if m_pad != m_rows:
        xt_col = jnp.pad(xt_col, ((0, 0), (0, m_pad - m_rows)))

    wt = conv_w.reshape(c_out, c_in * k_size * k_size)            # (Cout, K)

    # NOTE: casting xt_col / wt to bfloat16 here (accumulation stays f32) would
    # double MXU throughput on v5e/v6e/v7x; kept f32 to hold the 1e-4 check.

    # ---- pass 1: conv + per-channel sum / sumsq --------------------------
    y_t, sums, sumsqs = pl.pallas_call(
        _conv_stats_kernel,
        out_shape=(
            jax.ShapeDtypeStruct((c_out, m_pad), jnp.float32),
            jax.ShapeDtypeStruct((c_out, 1), jnp.float32),
            jax.ShapeDtypeStruct((c_out, 1), jnp.float32),
        ),
        grid=(num_tiles,),
        in_specs=[
            pl.BlockSpec((k_dim, block_m), lambda i: (0, i)),     # streamed X
            pl.BlockSpec((c_out, k_dim), lambda i: (0, 0)),       # resident W
        ],
        out_specs=(
            pl.BlockSpec((c_out, block_m), lambda i: (0, i)),     # yT tiles
            pl.BlockSpec((c_out, 1), lambda i: (0, 0)),           # resident sum
            pl.BlockSpec((c_out, 1), lambda i: (0, 0)),           # resident sumsq
        ),
        compiler_params=pltpu.CompilerParams(
            dimension_semantics=("arbitrary",),
            vmem_limit_bytes=_VMEM_LIMIT),
    )(xt_col, wt)

    # ---- tiny glue: fold BN into one per-channel scale & shift -----------
    inv_m = jnp.float32(1.0 / m_rows)
    mean = sums * inv_m
    var = jnp.maximum(sumsqs * inv_m - mean * mean, 0.0)          # biased var
    scale = bn_gamma.reshape(c_out, 1).astype(jnp.float32) * jax.lax.rsqrt(var + BN_EPS)
    shift = bn_beta.reshape(c_out, 1).astype(jnp.float32) - mean * scale

    # ---- pass 2: y*scale + shift, ReLU (parallel over M tiles) -----------
    out_t = pl.pallas_call(
        _bn_relu_kernel,
        out_shape=jax.ShapeDtypeStruct((c_out, m_pad), jnp.float32),
        grid=(num_tiles,),
        in_specs=[
            pl.BlockSpec((c_out, block_m), lambda i: (0, i)),
            pl.BlockSpec((c_out, 1), lambda i: (0, 0)),
            pl.BlockSpec((c_out, 1), lambda i: (0, 0)),
        ],
        out_specs=pl.BlockSpec((c_out, block_m), lambda i: (0, i)),
        compiler_params=pltpu.CompilerParams(
            dimension_semantics=("parallel",),
            vmem_limit_bytes=_VMEM_LIMIT),
    )(y_t, scale, shift)

    # (Cout, N*Ho*Wo) -> (N, Cout, Ho, Wo)
    out_t = out_t[:, :m_rows]
    return out_t.reshape(c_out, n, ho, wo).transpose(1, 0, 2, 3)


# ---------------------------------------------------------------------------
# Pure-JAX reference (mirrors PyTorch training-mode forward, including bias)
# ---------------------------------------------------------------------------
def _reference(x, conv_w, conv_b, bn_gamma, bn_beta, *, k_size, stride, padding):
    y = jax.lax.conv_general_dilated(
        x, conv_w, window_strides=(stride, stride),
        padding=((padding, padding), (padding, padding)),
        dimension_numbers=("NCHW", "OIHW", "NCHW"))
    y = y + conv_b[None, :, None, None]
    mean = jnp.mean(y, axis=(0, 2, 3), keepdims=True)
    var = jnp.mean((y - mean) ** 2, axis=(0, 2, 3), keepdims=True)
    y = (y - mean) * jax.lax.rsqrt(var + BN_EPS)
    y = y * bn_gamma[None, :, None, None] + bn_beta[None, :, None, None]
    return jnp.maximum(y, 0.0)


if __name__ == "__main__":
    # Module config: conv2DBatchNormRelu(in_channels=4, n_filters=8,
    #                                    k_size=3, stride=1, padding=1, bias=True)
    N, C_IN, H, W = 2, 4, 16, 16
    C_OUT, K, STRIDE, PAD = 8, 3, 1, 1

    key = jax.random.PRNGKey(0)
    kx, kw, kb, kg, kbe = jax.random.split(key, 5)

    x = jax.random.normal(kx, (N, C_IN, H, W), dtype=jnp.float32)
    conv_w = jax.random.normal(kw, (C_OUT, C_IN, K, K), dtype=jnp.float32) * 0.1
    conv_b = jax.random.normal(kb, (C_OUT,), dtype=jnp.float32) * 0.1
    bn_gamma = jax.random.normal(kg, (C_OUT,), dtype=jnp.float32) * 0.1 + 1.0
    bn_beta = jax.random.normal(kbe, (C_OUT,), dtype=jnp.float32) * 0.1

    out = conv2d_batchnorm_relu(x, conv_w, conv_b, bn_gamma, bn_beta,
                                k_size=K, stride=STRIDE, padding=PAD)
    out = jax.block_until_ready(out)

    ref = _reference(x, conv_w, conv_b, bn_gamma, bn_beta,
                     k_size=K, stride=STRIDE, padding=PAD)
    assert out.shape == (N, C_OUT, H, W), out.shape
    assert jnp.allclose(out, ref, atol=1e-4, rtol=1e-4), float(
        jnp.max(jnp.abs(out - ref)))

    print("KERNEL_OK")
</pallas_src>

<mosaic_0001>
module attributes {stable_mosaic.version = 11 : i64} {
  func.func @_conv_stats_kernel(%arg0: i32, %arg1: memref<36x256xf32, #tpu.memory_space<vmem>>, %arg2: memref<8x36xf32, #tpu.memory_space<vmem>>, %arg3: memref<8x256xf32, #tpu.memory_space<vmem>>, %arg4: memref<8x1xf32, #tpu.memory_space<vmem>>, %arg5: memref<8x1xf32, #tpu.memory_space<vmem>>) attributes {dimension_semantics = [#tpu.dimension_semantics<arbitrary>], iteration_bounds = array<i64: 2>, scalar_prefetch = 0 : i64, scratch_operands = 0 : i64, tpu.core_type = #tpu.core_type<tc>, window_params = [{transform_indices = @transform_0, window_bounds = array<i64: 36, 256>}, {pipeline_mode = #tpu.pipeline_mode<synchronous>, transform_indices = @transform_1, window_bounds = array<i64: 8, 36>}, {transform_indices = @transform_2, window_bounds = array<i64: 8, 256>}, {pipeline_mode = #tpu.pipeline_mode<synchronous>, transform_indices = @transform_3, window_bounds = array<i64: 8, 1>}, {pipeline_mode = #tpu.pipeline_mode<synchronous>, transform_indices = @transform_4, window_bounds = array<i64: 8, 1>}]} {
    %c0_i32 = arith.constant 0 : i32
    %0 = arith.cmpi eq, %arg0, %c0_i32 : i32
    %1 = arith.extui %0 : i1 to i32
    %c0_i32_0 = arith.constant 0 : i32
    %2 = arith.cmpi ne, %1, %c0_i32_0 : i32
    scf.if %2 {
      %cst_16 = arith.constant 0.000000e+00 : f32
      %18 = vector.broadcast %cst_16 : f32 to vector<8x1xf32>
      %c0_17 = arith.constant 0 : index
      %c0_18 = arith.constant 0 : index
      %19 = vector.load %arg4[%c0_17, %c0_18] : memref<8x1xf32, #tpu.memory_space<vmem>>, vector<8x1xf32>
      tpu.vector_store %arg4[%c0_17, %c0_18], %18 {strides = array<i32>} : memref<8x1xf32, #tpu.memory_space<vmem>>, vector<8x1xf32>,
      %cst_19 = arith.constant 0.000000e+00 : f32
      %20 = vector.broadcast %cst_19 : f32 to vector<8x1xf32>
      %c0_20 = arith.constant 0 : index
      %c0_21 = arith.constant 0 : index
      %21 = vector.load %arg5[%c0_20, %c0_21] : memref<8x1xf32, #tpu.memory_space<vmem>>, vector<8x1xf32>
      tpu.vector_store %arg5[%c0_20, %c0_21], %20 {strides = array<i32>} : memref<8x1xf32, #tpu.memory_space<vmem>>, vector<8x1xf32>,
    } else {
    }
    %c0 = arith.constant 0 : index
    %c0_1 = arith.constant 0 : index
    %3 = vector.load %arg2[%c0, %c0_1] : memref<8x36xf32, #tpu.memory_space<vmem>>, vector<8x36xf32>
    %c0_2 = arith.constant 0 : index
    %c0_3 = arith.constant 0 : index
    %4 = vector.load %arg1[%c0_2, %c0_3] : memref<36x256xf32, #tpu.memory_space<vmem>>, vector<36x256xf32>
    %cst = arith.constant dense<0.000000e+00> : vector<8x256xf32>
    %5 = tpu.matmul %3, %4, %cst {dimension_numbers = #tpu.dot_dimension_numbers<[1], [0], [0], [1], [0, 0, 1, 1], [], []>} : vector<8x36xf32>, vector<36x256xf32>, vector<8x256xf32> -> vector<8x256xf32>
    %c0_4 = arith.constant 0 : index
    %c0_5 = arith.constant 0 : index
    %6 = vector.load %arg3[%c0_4, %c0_5] : memref<8x256xf32, #tpu.memory_space<vmem>>, vector<8x256xf32>
    tpu.vector_store %arg3[%c0_4, %c0_5], %5 {strides = array<i32>} : memref<8x256xf32, #tpu.memory_space<vmem>>, vector<8x256xf32>,
    %c0_6 = arith.constant 0 : index
    %c0_7 = arith.constant 0 : index
    %7 = vector.load %arg4[%c0_6, %c0_7] : memref<8x1xf32, #tpu.memory_space<vmem>>, vector<8x1xf32>
    %cst_8 = arith.constant dense<0.000000e+00> : vector<8xf32>
    %8 = vector.multi_reduction <add>, %5, %cst_8 [1] : vector<8x256xf32> to vector<8xf32>
    %9 = vector.shape_cast %8 : vector<8xf32> to vector<8x1xf32>
    %10 = arith.addf %7, %9 : vector<8x1xf32>
    %c0_9 = arith.constant 0 : index
    %c0_10 = arith.constant 0 : index
    %11 = vector.load %arg4[%c0_9, %c0_10] : memref<8x1xf32, #tpu.memory_space<vmem>>, vector<8x1xf32>
    tpu.vector_store %arg4[%c0_9, %c0_10], %10 {strides = array<i32>} : memref<8x1xf32, #tpu.memory_space<vmem>>, vector<8x1xf32>,
    %c0_11 = arith.constant 0 : index
    %c0_12 = arith.constant 0 : index
    %12 = vector.load %arg5[%c0_11, %c0_12] : memref<8x1xf32, #tpu.memory_space<vmem>>, vector<8x1xf32>
    %13 = arith.mulf %5, %5 : vector<8x256xf32>
    %cst_13 = arith.constant dense<0.000000e+00> : vector<8xf32>
    %14 = vector.multi_reduction <add>, %13, %cst_13 [1] : vector<8x256xf32> to vector<8xf32>
    %15 = vector.shape_cast %14 : vector<8xf32> to vector<8x1xf32>
    %16 = arith.addf %12, %15 : vector<8x1xf32>
    %c0_14 = arith.constant 0 : index
    %c0_15 = arith.constant 0 : index
    %17 = vector.load %arg5[%c0_14, %c0_15] : memref<8x1xf32, #tpu.memory_space<vmem>>, vector<8x1xf32>
    tpu.vector_store %arg5[%c0_14, %c0_15], %16 {strides = array<i32>} : memref<8x1xf32, #tpu.memory_space<vmem>>, vector<8x1xf32>,
    return
  }
  func.func @transform_0(%arg0: i32) -> (i32, i32) {
    %c0_i32 = arith.constant 0 : i32
    %c0_i32_0 = arith.constant 0 : i32
    return %c0_i32, %arg0 : i32, i32
  }
  func.func @transform_1(%arg0: i32) -> (i32, i32) {
    %c0_i32 = arith.constant 0 : i32
    %c0_i32_0 = arith.constant 0 : i32
    %c0_i32_1 = arith.constant 0 : i32
    return %c0_i32, %c0_i32_0 : i32, i32
  }
  func.func @transform_2(%arg0: i32) -> (i32, i32) {
    %c0_i32 = arith.constant 0 : i32
    %c0_i32_0 = arith.constant 0 : i32
    return %c0_i32, %arg0 : i32, i32
  }
  func.func @transform_3(%arg0: i32) -> (i32, i32) {
    %c0_i32 = arith.constant 0 : i32
    %c0_i32_0 = arith.constant 0 : i32
    %c0_i32_1 = arith.constant 0 : i32
    return %c0_i32, %c0_i32_0 : i32, i32
  }
  func.func @transform_4(%arg0: i32) -> (i32, i32) {
    %c0_i32 = arith.constant 0 : i32
    %c0_i32_0 = arith.constant 0 : i32
    %c0_i32_1 = arith.constant 0 : i32
    return %c0_i32, %c0_i32_0 : i32, i32
  }
}

module attributes {stable_mosaic.version = 11 : i64} {
  func.func @_bn_relu_kernel(%arg0: i32, %arg1: memref<8x256xf32, #tpu.memory_space<vmem>>, %arg2: memref<8x1xf32, #tpu.memory_space<vmem>>, %arg3: memref<8x1xf32, #tpu.memory_space<vmem>>, %arg4: memref<8x256xf32, #tpu.memory_space<vmem>>) attributes {dimension_semantics = [#tpu.dimension_semantics<parallel>], iteration_bounds = array<i64: 2>, scalar_prefetch = 0 : i64, scratch_operands = 0 : i64, tpu.core_type = #tpu.core_type<tc>, window_params = [{transform_indices = @transform_0, window_bounds = array<i64: 8, 256>}, {pipeline_mode = #tpu.pipeline_mode<synchronous>, transform_indices = @transform_1, window_bounds = array<i64: 8, 1>}, {pipeline_mode = #tpu.pipeline_mode<synchronous>, transform_indices = @transform_2, window_bounds = array<i64: 8, 1>}, {transform_indices = @transform_3, window_bounds = array<i64: 8, 256>}]} {
    %c0 = arith.constant 0 : index
    %c0_0 = arith.constant 0 : index
    %0 = vector.load %arg1[%c0, %c0_0] : memref<8x256xf32, #tpu.memory_space<vmem>>, vector<8x256xf32>
    %c0_1 = arith.constant 0 : index
    %c0_2 = arith.constant 0 : index
    %1 = vector.load %arg2[%c0_1, %c0_2] : memref<8x1xf32, #tpu.memory_space<vmem>>, vector<8x1xf32>
    %2 = vector.broadcast %1 : vector<8x1xf32> to vector<8x256xf32>
    %3 = arith.mulf %0, %2 : vector<8x256xf32>
    %c0_3 = arith.constant 0 : index
    %c0_4 = arith.constant 0 : index
    %4 = vector.load %arg3[%c0_3, %c0_4] : memref<8x1xf32, #tpu.memory_space<vmem>>, vector<8x1xf32>
    %5 = vector.broadcast %4 : vector<8x1xf32> to vector<8x256xf32>
    %6 = arith.addf %3, %5 : vector<8x256xf32>
    %cst = arith.constant 0.000000e+00 : f32
    %7 = vector.broadcast %cst : f32 to vector<8x256xf32>
    %8 = arith.maximumf %6, %7 : vector<8x256xf32>
    %c0_5 = arith.constant 0 : index
    %c0_6 = arith.constant 0 : index
    %9 = vector.load %arg4[%c0_5, %c0_6] : memref<8x256xf32, #tpu.memory_space<vmem>>, vector<8x256xf32>
    tpu.vector_store %arg4[%c0_5, %c0_6], %8 {strides = array<i32>} : memref<8x256xf32, #tpu.memory_space<vmem>>, vector<8x256xf32>,
    return
  }
  func.func @transform_0(%arg0: i32) -> (i32, i32) {
    %c0_i32 = arith.constant 0 : i32
    %c0_i32_0 = arith.constant 0 : i32
    return %c0_i32, %arg0 : i32, i32
  }
  func.func @transform_1(%arg0: i32) -> (i32, i32) {
    %c0_i32 = arith.constant 0 : i32
    %c0_i32_0 = arith.constant 0 : i32
    %c0_i32_1 = arith.constant 0 : i32
    return %c0_i32, %c0_i32_0 : i32, i32
  }
  func.func @transform_2(%arg0: i32) -> (i32, i32) {
    %c0_i32 = arith.constant 0 : i32
    %c0_i32_0 = arith.constant 0 : i32
    %c0_i32_1 = arith.constant 0 : i32
    return %c0_i32, %c0_i32_0 : i32, i32
  }
  func.func @transform_3(%arg0: i32) -> (i32, i32) {
    %c0_i32 = arith.constant 0 : i32
    %c0_i32_0 = arith.constant 0 : i32
    return %c0_i32, %arg0 : i32, i32
  }
}

</mosaic_0001>

<llo_original>
// kernel: conv2d_batchnorm_relu.3
$region0: #{conv2d_batchnorm_relu.3}
  #allocation0 [shape = 'u32[]', space=smem, size = 0x4, offset = 0x4, fixed_abs, tag = 'smem constant byte address 0x4 - core index']
  #allocation1 [shape = 'u32[144,128]{1,0:T(1,128)}', space=vmem, size = 0x12000, scoped, tag = 'internal scratch']
  %s0 = inlined_call_operand.vmem [shape: f32[8,512], index: 0, kind: input, shape index: {}]
  %s1 = inlined_call_operand.vmem [shape: f32[8,1], index: 1, kind: input, shape index: {}]
  %s2 = inlined_call_operand.vmem [shape: f32[8,1], index: 2, kind: input, shape index: {}]
  %s3 = inlined_call_operand.vmem [shape: f32[8,512], index: 3, kind: output, shape index: {}]
  %s4 = sld [smem:[#allocation0]]
  $region45: #{conv2d_batchnorm_relu.3} parent=0
    _
  %s6 = ssub.s32 1, %s4
  %s7 = scalar_select 0, %s6, %s4
  loop: start=0, step=1, limit=4
  $region2: #{conv2d_batchnorm_relu.3} parent=0 // loop_pre_header
    _
  $region3: #{conv2d_batchnorm_relu.3} parent=0 // loop_header
    %s9 = sphi 0, %s13
    %p10 = scmp.ge.s32.totalorder %s9, 4
    %s19 = sphi 0, %s21
    %s22 = sphi 0, %s19
    %s23 = sphi 0, %s22
    %s39 = sphi 0, %s23
    %s43 = sphi 0, %s43
    %s45 = sphi 0, %s43
    %s46 = sphi 0, %s45
    %s60 = sphi 0, %s46
    %s64 = sphi 0, %s64
    %s66 = sphi 0, %s64
    %s67 = sphi 0, %s66
    %s81 = sphi 0, %s67
    %s87 = sphi 0, %s89
    %s90 = sphi 0, %s87
    %s91 = sphi 0, %s90
    %s107 = sphi 0, %s91
  $region4: #{conv2d_batchnorm_relu.3} parent=0 // loop_header_branch
    %12 = sbr.rel (%p10) target = $region8
  $region5: #{conv2d_batchnorm_relu.3} parent=0 // loop_body
    %s14 = ssub.s32 %s9, 1
    %s15 = ssub.s32 %s9, 2
    %s16 = sadd.s32 %s9, 1
    %s17 = ssub.s32 %s9, %s16
    %p18 = scmp.eq.s32.totalorder %s17, 0
    %s20 = sadd.s32 %s19, 1
    %s21 = scalar_select %p18, %s19, %s20
    %p24 = pneg %p18
    %p25 = scmp.eq.s32.totalorder %s9, 1
    %p26 = por %p24, %p25
    %p27 = scmp.ne.s32.totalorder %s19, %s22
    %p28 = scmp.eq.s32.totalorder %s9, 0
    %p29 = por %p27, %p28
    %p30 = scmp.ne.s32.totalorder %s19, %s22
    %p31 = scmp.eq.s32.totalorder %s14, 1
    %p32 = por %p30, %p31
    %p33 = scmp.ne.s32.totalorder %s22, %s23
    %p34 = scmp.eq.s32.totalorder %s14, 0
    %p35 = por %p33, %p34
    %p36 = scmp.ne.s32.totalorder %s22, %s23
    %p37 = scmp.eq.s32.totalorder %s15, 1
    %p38 = por %p36, %p37
    %p40 = scmp.ne.s32.totalorder %s23, %s39
    %p41 = scmp.eq.s32.totalorder %s15, 0
    %p42 = por %p40, %p41
    %s44 = sadd.s32 %s43, 1
    %p47 = scmp.eq.s32.totalorder %s9, 1
    %p48 = scmp.ne.s32.totalorder %s43, %s45
    %p49 = scmp.eq.s32.totalorder %s9, 0
    %p50 = por %p48, %p49
    %p51 = scmp.ne.s32.totalorder %s43, %s45
    %p52 = scmp.eq.s32.totalorder %s14, 1
    %p53 = por %p51, %p52
    %p54 = scmp.ne.s32.totalorder %s45, %s46
    %p55 = scmp.eq.s32.totalorder %s14, 0
    %p56 = por %p54, %p55
    %p57 = scmp.ne.s32.totalorder %s45, %s46
    %p58 = scmp.eq.s32.totalorder %s15, 1
    %p59 = por %p57, %p58
    %p61 = scmp.ne.s32.totalorder %s46, %s60
    %p62 = scmp.eq.s32.totalorder %s15, 0
    %p63 = por %p61, %p62
    %s65 = sadd.s32 %s64, 1
    %p68 = scmp.eq.s32.totalorder %s9, 1
    %p69 = scmp.ne.s32.totalorder %s64, %s66
    %p70 = scmp.eq.s32.totalorder %s9, 0
    %p71 = por %p69, %p70
    %p72 = scmp.ne.s32.totalorder %s64, %s66
    %p73 = scmp.eq.s32.totalorder %s14, 1
    %p74 = por %p72, %p73
    %p75 = scmp.ne.s32.totalorder %s66, %s67
    %p76 = scmp.eq.s32.totalorder %s14, 0
    %p77 = por %p75, %p76
    %p78 = scmp.ne.s32.totalorder %s66, %s67
    %p79 = scmp.eq.s32.totalorder %s15, 1
    %p80 = por %p78, %p79
    %p82 = scmp.ne.s32.totalorder %s67, %s81
    %p83 = scmp.eq.s32.totalorder %s15, 0
    %p84 = por %p82, %p83
    %s85 = ssub.s32 %s9, %s16
    %p86 = scmp.eq.s32.totalorder %s85, 0
    %s88 = sadd.s32 %s87, 1
    %s89 = scalar_select %p86, %s87, %s88
    %p92 = pneg %p86
    %p93 = scmp.eq.s32.totalorder %s9, 1
    %p94 = por %p92, %p93
    %p95 = scmp.ne.s32.totalorder %s87, %s90
    %p96 = scmp.eq.s32.totalorder %s9, 0
    %p97 = por %p95, %p96
    %p98 = scmp.ne.s32.totalorder %s87, %s90
    %p99 = scmp.eq.s32.totalorder %s14, 1
    %p100 = por %p98, %p99
    %p101 = scmp.ne.s32.totalorder %s90, %s91
    %p102 = scmp.eq.s32.totalorder %s14, 0
    %p103 = por %p101, %p102
    %p104 = scmp.ne.s32.totalorder %s90, %s91
    %p105 = scmp.eq.s32.totalorder %s15, 1
    %p106 = por %p104, %p105
    %p108 = scmp.ne.s32.totalorder %s91, %s107
    %p109 = scmp.eq.s32.totalorder %s15, 0
    %p110 = por %p108, %p109
    %p111 = scmp.le.s32.totalorder 1, %s9
    %p112 = scmp.lt.s32.totalorder %s9, 3
    %p113 = pnand %p111, %p112
    %p114 = pneg %p113
    // Predicated region
    $region9: #{conv2d_batchnorm_relu.3} parent=5 // pred_check
      _
    $region10: #{conv2d_batchnorm_relu.3} parent=5 // pred_check_branch
      %116 = sbr.rel (%p113) target = $region12
    $region11: #{conv2d_batchnorm_relu.3} parent=5 // pred_region
      %s117 = ssub.s32 %s9, 1
      // Predicated region
      $region13: #{conv2d_batchnorm_relu.3} parent=11 // pred_check
        %p118 = pneg %p56
      $region14: #{conv2d_batchnorm_relu.3} parent=11 // pred_check_branch
        %120 = sbr.rel (%p118) target = $region16
      $region15: #{conv2d_batchnorm_relu.3} parent=11 // pred_region
        _
      $region16: #{conv2d_batchnorm_relu.3} parent=11 // pred_fallthru
        _
      // Predicated region
      $region17: #{conv2d_batchnorm_relu.3} parent=11 // pred_check
        %p121 = pneg %p77
      $region18: #{conv2d_batchnorm_relu.3} parent=11 // pred_check_branch
        %123 = sbr.rel (%p121) target = $region20
      $region19: #{conv2d_batchnorm_relu.3} parent=11 // pred_region
        _
      $region20: #{conv2d_batchnorm_relu.3} parent=11 // pred_fallthru
        _
    $region12: #{conv2d_batchnorm_relu.3} parent=5 // pred_fallthru
      _
    %p124 = scmp.lt.s32.totalorder %s9, 2
    // Predicated region
    $region21: #{conv2d_batchnorm_relu.3} parent=5 // pred_check
      %p125 = pneg %p124
    $region22: #{conv2d_batchnorm_relu.3} parent=5 // pred_check_branch
      %127 = sbr.rel (%p125) target = $region24
    $region23: #{conv2d_batchnorm_relu.3} parent=5 // pred_region
      // Predicated region
      $region25: #{conv2d_batchnorm_relu.3} parent=23 // pred_check
        %p128 = pneg %p29
      $region26: #{conv2d_batchnorm_relu.3} parent=23 // pred_check_branch
        %130 = sbr.rel (%p128) target = $region28
      $region27: #{conv2d_batchnorm_relu.3} parent=23 // pred_region
        %s131 = smul.u32 2, %s9
        %p132 = scmp.lt.s32.totalorder %s131, 3
        %s133 = scalar_select %p132, %s131, 3
        %s134 = smul.addr %s133, 8
        %s135 = scalar_lea.vmem %s0, %s134
        %s136 = smul.u32 2, %s9
      $region28: #{conv2d_batchnorm_relu.3} parent=23 // pred_fallthru
        _
    $region24: #{conv2d_batchnorm_relu.3} parent=5 // pred_fallthru
      _
    %p137 = scmp.le.s32.totalorder 1, %s9
    %p138 = scmp.lt.s32.totalorder %s9, 3
    %p139 = pnand %p137, %p138
    %p140 = pneg %p139
    // Predicated region
    $region29: #{conv2d_batchnorm_relu.3} parent=5 // pred_check
      _
    $region30: #{conv2d_batchnorm_relu.3} parent=5 // pred_check_branch
      %142 = sbr.rel (%p139) target = $region32
    $region31: #{conv2d_batchnorm_relu.3} parent=5 // pred_region
      %s143 = ssub.s32 %s9, 1
      %s144 = smul.u32 2, %s14
      %p145 = scmp.lt.s32.totalorder %s144, 3
      %s146 = scalar_select %p145, %s144, 3
      %s147 = smul.addr %s146, 8
      %s148 = scalar_lea.vmem %s0, %s147
      %p149 = pneg %p35
      %p150 = pneg %p32
      %p151 = pneg %p56
      %p152 = pneg %p53
      %p153 = pneg %p77
      %p154 = pneg %p74
      %p155 = pneg %p103
      %p156 = pneg %p100
      %s157 = smul.u32 2, %s14
      %p158 = scmp.lt.s32.totalorder %s157, 3
      %s159 = scalar_select %p158, %s157, 3
      %s160 = smul.addr %s159, 8
      %s161 = scalar_lea.vmem %s3, %s160
      %s162 = smul.u32 2, %s14
      %p163 = scmp.lt.s32.totalorder %s162, 3
      %s164 = scalar_select %p163, %s162, 3
      %s165 = smul.addr %s164, 8
      %s166 = scalar_lea.vmem %s0, %s165
      %s167 = smul.u32 2, %s14
      %s168 = smul.u32 2, %s14
      %p169 = scmp.lt.s32.totalorder %s168, 3
      %s170 = scalar_select %p169, %s168, 3
      %s171 = smul.addr %s170, 8
      %s172 = scalar_lea.vmem %s3, %s171
      %s173 = smul.u32 2, %s14
      %v174 = vld [vmem:[%s166] sm:$0xff]
      %v175 = vld [vmem:[%s166 + $0x8] sm:$0xff]
      %v176 = vld [vmem:[%s1] sm:$0xff]
      %178 = vset.pattern.permute.xlu0 0
      %179 = vperm.xlu0 %178, %v176
      %v180 = vpop.permute.xlu0 %179
      %v182 = vmul.f32 %v174, %v180
      %v183 = vmul.f32 %v175, %v180
      %v184 = vld [vmem:[%s2] sm:$0xff]
      %186 = vset.pattern.permute.xlu0 0
      %187 = vperm.xlu0 %186, %v184
      %v188 = vpop.permute.xlu0 %187
      %v190 = vadd.f32 %v182, %v188
      %v191 = vadd.f32 %v183, %v188
      %v192 = vmax.f32 %v190, 0.0
      %v193 = vmax.f32 %v191, 0.0
      %194 = vst [vmem:[%s172] sm:$0xff] %v192
      %195 = vst [vmem:[%s172 + $0x8] sm:$0xff] %v193
      %s196 = smul.u32 2, %s14
      %p197 = scmp.lt.s32.totalorder %s196, 3
      %s198 = scalar_select %p197, %s196, 3
      %s199 = smul.addr %s198, 8
      %s200 = scalar_lea.vmem %s3, %s199
      // Predicated region
      $region33: #{conv2d_batchnorm_relu.3} parent=31 // pred_check
        %p201 = pneg %p100
      $region34: #{conv2d_batchnorm_relu.3} parent=31 // pred_check_branch
        %203 = sbr.rel (%p201) target = $region36
      $region35: #{conv2d_batchnorm_relu.3} parent=31 // pred_region
        %s204 = smul.u32 2, %s14
      $region36: #{conv2d_batchnorm_relu.3} parent=31 // pred_fallthru
        _
    $region32: #{conv2d_batchnorm_relu.3} parent=5 // pred_fallthru
      _
    %p205 = scmp.le.s32.totalorder 2, %s9
    // Predicated region
    $region37: #{conv2d_batchnorm_relu.3} parent=5 // pred_check
      %p206 = pneg %p205
    $region38: #{conv2d_batchnorm_relu.3} parent=5 // pred_check_branch
      %208 = sbr.rel (%p206) target = $region40
    $region39: #{conv2d_batchnorm_relu.3} parent=5 // pred_region
      %s209 = ssub.s32 %s9, 2
      // Predicated region
      $region41: #{conv2d_batchnorm_relu.3} parent=39 // pred_check
        %p210 = pneg %p106
      $region42: #{conv2d_batchnorm_relu.3} parent=39 // pred_check_branch
        %212 = sbr.rel (%p210) target = $region44
      $region43: #{conv2d_batchnorm_relu.3} parent=39 // pred_region
        %s213 = smul.u32 2, %s15
        %p214 = scmp.lt.s32.totalorder %s213, 3
        %s215 = scalar_select %p214, %s213, 3
        %s216 = smul.addr %s215, 8
        %s217 = scalar_lea.vmem %s3, %s216
      $region44: #{conv2d_batchnorm_relu.3} parent=39 // pred_fallthru
        _
    $region40: #{conv2d_batchnorm_relu.3} parent=5 // pred_fallthru
      _
  $region6: #{conv2d_batchnorm_relu.3} parent=0 // loop_footer
    %s13 = sadd.s32 1, %s9
  $region7: #{conv2d_batchnorm_relu.3} parent=0 // loop_footer_branch
    %8 = sbr.rel target = $region3
  $region8: #{conv2d_batchnorm_relu.3} parent=0 // loop_exit
    _

// kernel: conv2d_batchnorm_relu.2
$region0: #{conv2d_batchnorm_relu.2}
  #allocation0 [shape = 'u32[]', space=smem, size = 0x4, offset = 0x4, fixed_abs, tag = 'smem constant byte address 0x4 - core index']
  #allocation1 [shape = 'u32[144,128]{1,0:T(1,128)}', space=vmem, size = 0x12000, scoped, tag = 'internal scratch']
  %s0 = inlined_call_operand.vmem [shape: f32[36,512], index: 0, kind: input, shape index: {}]
  %s1 = inlined_call_operand.vmem [shape: f32[8,36], index: 1, kind: input, shape index: {}]
  %s2 = inlined_call_operand.vmem [shape: f32[8,512], index: 2, kind: output, shape index: {0}]
  %s3 = inlined_call_operand.vmem [shape: f32[8,1], index: 3, kind: output, shape index: {1}]
  %s4 = inlined_call_operand.vmem [shape: f32[8,1], index: 4, kind: output, shape index: {2}]
  %5 = xla_tuple %s2, %s3, %s4
  %s6 = sld [smem:[#allocation0]]
  $region84: #{conv2d_batchnorm_relu.2} parent=0
    _
  %s8 = ssub.s32 1, %s6
  %s9 = scalar_select 0, %s8, %s6
  $region1: #{conv2d_batchnorm_relu.2} parent=0
    #allocation2 [shape = 'u8[81920]{0}', space=vmem, size = 0x14000, scoped, tag = 'input window, operand 0']
    loop: start=0, step=1, limit=4
    $region2: #{conv2d_batchnorm_relu.2} parent=1 // loop_pre_header
      _
    $region3: #{conv2d_batchnorm_relu.2} parent=1 // loop_header
      %s11 = sphi 0, %s15
      %p12 = scmp.ge.s32.totalorder %s11, 4
      %s21 = sphi 0, %s23
      %s24 = sphi 0, %s21
      %s25 = sphi 0, %s24
      %s41 = sphi 0, %s25
      %s45 = sphi 0, %s45
      %s47 = sphi 0, %s45
      %s48 = sphi 0, %s47
      %s62 = sphi 0, %s48
      %s68 = sphi 0, %s70
      %s71 = sphi 0, %s68
      %s72 = sphi 0, %s71
      %s88 = sphi 0, %s72
      %s92 = sphi 0, %s92
      %s94 = sphi 0, %s92
      %s95 = sphi 0, %s94
      %s109 = sphi 0, %s95
      %s113 = sphi 0, %s113
      %s115 = sphi 0, %s113
      %s116 = sphi 0, %s115
      %s130 = sphi 0, %s116
    $region4: #{conv2d_batchnorm_relu.2} parent=1 // loop_header_branch
      %14 = sbr.rel (%p12) target = $region8
    $region5: #{conv2d_batchnorm_relu.2} parent=1 // loop_body
      %s16 = ssub.s32 %s11, 1
      %s17 = ssub.s32 %s11, 2
      %s18 = sadd.s32 %s11, 1
      %s19 = ssub.s32 %s11, %s18
      %p20 = scmp.eq.s32.totalorder %s19, 0
      %s22 = sadd.s32 %s21, 1
      %s23 = scalar_select %p20, %s21, %s22
      %p26 = pneg %p20
      %p27 = scmp.eq.s32.totalorder %s11, 1
      %p28 = por %p26, %p27
      %p29 = scmp.ne.s32.totalorder %s21, %s24
      %p30 = scmp.eq.s32.totalorder %s11, 0
      %p31 = por %p29, %p30
      %p32 = scmp.ne.s32.totalorder %s21, %s24
      %p33 = scmp.eq.s32.totalorder %s16, 1
      %p34 = por %p32, %p33
      %p35 = scmp.ne.s32.totalorder %s24, %s25
      %p36 = scmp.eq.s32.totalorder %s16, 0
      %p37 = por %p35, %p36
      %p38 = scmp.ne.s32.totalorder %s24, %s25
      %p39 = scmp.eq.s32.totalorder %s17, 1
      %p40 = por %p38, %p39
      %p42 = scmp.ne.s32.totalorder %s25, %s41
      %p43 = scmp.eq.s32.totalorder %s17, 0
      %p44 = por %p42, %p43
      %s46 = sadd.s32 %s45, 1
      %p49 = scmp.eq.s32.totalorder %s11, 1
      %p50 = scmp.ne.s32.totalorder %s45, %s47
      %p51 = scmp.eq.s32.totalorder %s11, 0
      %p52 = por %p50, %p51
      %p53 = scmp.ne.s32.totalorder %s45, %s47
      %p54 = scmp.eq.s32.totalorder %s16, 1
      %p55 = por %p53, %p54
      %p56 = scmp.ne.s32.totalorder %s47, %s48
      %p57 = scmp.eq.s32.totalorder %s16, 0
      %p58 = por %p56, %p57
      %p59 = scmp.ne.s32.totalorder %s47, %s48
      %p60 = scmp.eq.s32.totalorder %s17, 1
      %p61 = por %p59, %p60
      %p63 = scmp.ne.s32.totalorder %s48, %s62
      %p64 = scmp.eq.s32.totalorder %s17, 0
      %p65 = por %p63, %p64
      %s66 = ssub.s32 %s11, %s18
      %p67 = scmp.eq.s32.totalorder %s66, 0
      %s69 = sadd.s32 %s68, 1
      %s70 = scalar_select %p67, %s68, %s69
      %p73 = pneg %p67
      %p74 = scmp.eq.s32.totalorder %s11, 1
      %p75 = por %p73, %p74
      %p76 = scmp.ne.s32.totalorder %s68, %s71
      %p77 = scmp.eq.s32.totalorder %s11, 0
      %p78 = por %p76, %p77
      %p79 = scmp.ne.s32.totalorder %s68, %s71
      %p80 = scmp.eq.s32.totalorder %s16, 1
      %p81 = por %p79, %p80
      %p82 = scmp.ne.s32.totalorder %s71, %s72
      %p83 = scmp.eq.s32.totalorder %s16, 0
      %p84 = por %p82, %p83
      %p85 = scmp.ne.s32.totalorder %s71, %s72
      %p86 = scmp.eq.s32.totalorder %s17, 1
      %p87 = por %p85, %p86
      %p89 = scmp.ne.s32.totalorder %s72, %s88
      %p90 = scmp.eq.s32.totalorder %s17, 0
      %p91 = por %p89, %p90
      %s93 = sadd.s32 %s92, 1
      %p96 = scmp.eq.s32.totalorder %s11, 1
      %p97 = scmp.ne.s32.totalorder %s92, %s94
      %p98 = scmp.eq.s32.totalorder %s11, 0
      %p99 = por %p97, %p98
      %p100 = scmp.ne.s32.totalorder %s92, %s94
      %p101 = scmp.eq.s32.totalorder %s16, 1
      %p102 = por %p100, %p101
      %p103 = scmp.ne.s32.totalorder %s94, %s95
      %p104 = scmp.eq.s32.totalorder %s16, 0
      %p105 = por %p103, %p104
      %p106 = scmp.ne.s32.totalorder %s94, %s95
      %p107 = scmp.eq.s32.totalorder %s17, 1
      %p108 = por %p106, %p107
      %p110 = scmp.ne.s32.totalorder %s95, %s109
      %p111 = scmp.eq.s32.totalorder %s17, 0
      %p112 = por %p110, %p111
      %s114 = sadd.s32 %s113, 1
      %p117 = scmp.eq.s32.totalorder %s11, 1
      %p118 = scmp.ne.s32.totalorder %s113, %s115
      %p119 = scmp.eq.s32.totalorder %s11, 0
      %p120 = por %p118, %p119
      %p121 = scmp.ne.s32.totalorder %s113, %s115
      %p122 = scmp.eq.s32.totalorder %s16, 1
      %p123 = por %p121, %p122
      %p124 = scmp.ne.s32.totalorder %s115, %s116
      %p125 = scmp.eq.s32.totalorder %s16, 0
      %p126 = por %p124, %p125
      %p127 = scmp.ne.s32.totalorder %s115, %s116
      %p128 = scmp.eq.s32.totalorder %s17, 1
      %p129 = por %p127, %p128
      %p131 = scmp.ne.s32.totalorder %s116, %s130
      %p132 = scmp.eq.s32.totalorder %s17, 0
      %p133 = por %p131, %p132
      %p134 = scmp.le.s32.totalorder 1, %s11
      %p135 = scmp.lt.s32.totalorder %s11, 3
      %p136 = pnand %p134, %p135
      %p137 = pneg %p136
      // Predicated region
      $region9: #{conv2d_batchnorm_relu.2} parent=5 // pred_check
        _
      $region10: #{conv2d_batchnorm_relu.2} parent=5 // pred_check_branch
        %139 = sbr.rel (%p136) target = $region12
      $region11: #{conv2d_batchnorm_relu.2} parent=5 // pred_region
        %s140 = ssub.s32 %s11, 1
        // Predicated region
        $region13: #{conv2d_batchnorm_relu.2} parent=11 // pred_check
          %p141 = pneg %p58
        $region14: #{conv2d_batchnorm_relu.2} parent=11 // pred_check_branch
          %143 = sbr.rel (%p141) target = $region16
        $region15: #{conv2d_batchnorm_relu.2} parent=11 // pred_region
          _
        $region16: #{conv2d_batchnorm_relu.2} parent=11 // pred_fallthru
          _
      $region12: #{conv2d_batchnorm_relu.2} parent=5 // pred_fallthru
        _
      %p144 = scmp.lt.s32.totalorder %s11, 2
      // Predicated region
      $region17: #{conv2d_batchnorm_relu.2} parent=5 // pred_check
        %p145 = pneg %p144
      $region18: #{conv2d_batchnorm_relu.2} parent=5 // pred_check_branch
        %147 = sbr.rel (%p145) target = $region20
      $region19: #{conv2d_batchnorm_relu.2} parent=5 // pred_region
        // Predicated region
        $region21: #{conv2d_batchnorm_relu.2} parent=19 // pred_check
          %p148 = pneg %p31
        $region22: #{conv2d_batchnorm_relu.2} parent=19 // pred_check_branch
          %150 = sbr.rel (%p148) target = $region24
        $region23: #{conv2d_batchnorm_relu.2} parent=19 // pred_region
          %s151 = sand.u32 %s21, 1
          %s152 = sand.u32 %s21, 1
          %s153 = smul.addr %s152, 80
          %s154 = scalar_lea.vmem [#allocation2], %s153
          %s155 = smul.u32 2, %s11
          %s156 = smul.addr %s155, 8
          %s157 = scalar_lea.vmem %s0, %s156
          // Predicated region
          $region25: #{conv2d_batchnorm_relu.2} parent=23 // pred_check
            _
          $region26: #{conv2d_batchnorm_relu.2} parent=23 // pred_check_branch
            %159 = sbr.rel (0) target = $region28
          $region27: #{conv2d_batchnorm_relu.2} parent=23 // pred_region
            // Predicated region
            $region29: #{conv2d_batchnorm_relu.2} parent=27 // pred_check
              _
            $region30: #{conv2d_batchnorm_relu.2} parent=27 // pred_check_branch
              %161 = sbr.rel (0) target = $region32
            $region31: #{conv2d_batchnorm_relu.2} parent=27 // pred_region
              loop: start=0, step=1, limit=1
              $region33: #{conv2d_batchnorm_relu.2} parent=31 // loop_pre_header
                _
              $region34: #{conv2d_batchnorm_relu.2} parent=31 // loop_header
                %s163 = sphi 0, %s167
                %p164 = scmp.ge.s32.totalorder %s163, 1
                %s168 = sphi %s157, %s157
                %s169 = sphi %s154, %s154
              $region35: #{conv2d_batchnorm_relu.2} parent=31 // loop_header_branch
                %166 = sbr.rel (%p164) target = $region39
              $region36: #{conv2d_batchnorm_relu.2} parent=31 // loop_body
                %v170 = vld [vmem:[%s168] sm:$0xff]
                %171 = vst [vmem:[%s169] sm:$0xff] %v170
                %v172 = vld [vmem:[%s168 + $0x8] sm:$0xff]
                %173 = vst [vmem:[%s169 + $0x8] sm:$0xff] %v172
                %v174 = vld [vmem:[%s168 + $0x20] sm:$0xff]
                %175 = vst [vmem:[%s169 + $0x10] sm:$0xff] %v174
                %v176 = vld [vmem:[%s168 + $0x28] sm:$0xff]
                %177 = vst [vmem:[%s169 + $0x18] sm:$0xff] %v176
                %v178 = vld [vmem:[%s168 + $0x40] sm:$0xff]
                %179 = vst [vmem:[%s169 + $0x20] sm:$0xff] %v178
                %v180 = vld [vmem:[%s168 + $0x48] sm:$0xff]
                %181 = vst [vmem:[%s169 + $0x28] sm:$0xff] %v180
                %v182 = vld [vmem:[%s168 + $0x60] sm:$0xff]
                %183 = vst [vmem:[%s169 + $0x30] sm:$0xff] %v182
                %v184 = vld [vmem:[%s168 + $0x68] sm:$0xff]
                %185 = vst [vmem:[%s169 + $0x38] sm:$0xff] %v184
                %v186 = vld [vmem:[%s168 + $0x80] sm:$0xff]
                %187 = vst [vmem:[%s169 + $0x40] sm:$0xff] %v186
                %v188 = vld [vmem:[%s168 + $0x88] sm:$0xff]
                %189 = vst [vmem:[%s169 + $0x48] sm:$0xff] %v188
              $region37: #{conv2d_batchnorm_relu.2} parent=31 // loop_footer
                %s167 = sadd.s32 1, %s163
              $region38: #{conv2d_batchnorm_relu.2} parent=31 // loop_footer_branch
                %162 = sbr.rel target = $region34
              $region39: #{conv2d_batchnorm_relu.2} parent=31 // loop_exit
                _
            $region32: #{conv2d_batchnorm_relu.2} parent=27 // pred_fallthru
              _
            // Predicated region
            $region40: #{conv2d_batchnorm_relu.2} parent=27 // pred_check
              _
            $region41: #{conv2d_batchnorm_relu.2} parent=27 // pred_check_branch
              %191 = sbr.rel target = $region43
            $region42: #{conv2d_batchnorm_relu.2} parent=27 // pred_region
              _
            $region43: #{conv2d_batchnorm_relu.2} parent=27 // pred_fallthru
              _
          $region28: #{conv2d_batchnorm_relu.2} parent=23 // pred_fallthru
            _
          %192 = vnop
        $region24: #{conv2d_batchnorm_relu.2} parent=19 // pred_fallthru
          _
      $region20: #{conv2d_batchnorm_relu.2} parent=5 // pred_fallthru
        _
      %p193 = scmp.le.s32.totalorder 1, %s11
      %p194 = scmp.lt.s32.totalorder %s11, 3
      %p195 = pnand %p193, %p194
      %p196 = pneg %p195
      // Predicated region
      $region44: #{conv2d_batchnorm_relu.2} parent=5 // pred_check
        _
      $region45: #{conv2d_batchnorm_relu.2} parent=5 // pred_check_branch
        %198 = sbr.rel (%p195) target = $region47
      $region46: #{conv2d_batchnorm_relu.2} parent=5 // pred_region
        %s199 = ssub.s32 %s11, 1
        %s200 = sand.u32 %s24, 1
        %s201 = sand.u32 %s24, 1
        %s202 = smul.addr %s201, 80
        %s203 = scalar_lea.vmem [#allocation2], %s202
        // Predicated region
        $region48: #{conv2d_batchnorm_relu.2} parent=46 // pred_check
          %p204 = pneg %p37
        $region49: #{conv2d_batchnorm_relu.2} parent=46 // pred_check_branch
          %206 = sbr.rel (%p204) target = $region51
        $region50: #{conv2d_batchnorm_relu.2} parent=46 // pred_region
          _
        $region51: #{conv2d_batchnorm_relu.2} parent=46 // pred_fallthru
          _
        %s207 = sand.u32 %s24, 1
        %s208 = sand.u32 %s24, 1
        %s209 = smul.addr %s208, 80
        %s210 = scalar_lea.vmem [#allocation2], %s209
        %p211 = pneg %p37
        %p212 = pneg %p34
        %p213 = pneg %p58
        %p214 = pneg %p55
        %p215 = pneg %p84
        %p216 = pneg %p81
        %s217 = smul.u32 2, %s16
        %p218 = scmp.lt.s32.totalorder %s217, 3
        %s219 = scalar_select %p218, %s217, 3
        %s220 = smul.addr %s219, 8
        %s221 = scalar_lea.vmem %s2, %s220
        %p222 = pneg %p105
        %p223 = pneg %p102
        %p224 = pneg %p126
        %p225 = pneg %p123
        %s226 = smul.u32 2, %s16
        %s227 = smul.u32 2, %s16
        %p228 = scmp.lt.s32.totalorder %s227, 3
        %s229 = scalar_select %p228, %s227, 3
        %s230 = smul.addr %s229, 8
        %s231 = scalar_lea.vmem %s2, %s230
        %s232 = smul.u32 2, %s16
        %p233 = scmp.eq.s32.totalorder %s16, 0
        // Predicated region
        $region52: #{conv2d_batchnorm_relu.2} parent=46 // pred_check
          %p234 = pneg %p233
        $region53: #{conv2d_batchnorm_relu.2} parent=46 // pred_check_branch
          %236 = sbr.rel (%p234) target = $region55
        $region54: #{conv2d_batchnorm_relu.2} parent=46 // pred_region
          %vm237 = vcmask 7168
          %238 = vst.msk [vmem:[%s3] sm:$0xff] %vm237, 0.0
          %239 = vst.msk [vmem:[%s4] sm:$0xff] %vm237, 0.0
        $region55: #{conv2d_batchnorm_relu.2} parent=46 // pred_fallthru
          _
        %v240 = vld [vmem:[%s1] sm:$0xff]
        %v241 = vld [vmem:[%s203] sm:$0xff]
        %v242 = vld [vmem:[%s203 + $0x8] sm:$0xff]
        %v243 = vld [vmem:[%s203 + $0x10] sm:$0xff]
        %v244 = vld [vmem:[%s203 + $0x18] sm:$0xff]
        %v245 = vld [vmem:[%s203 + $0x20] sm:$0xff]
        %v246 = vld [vmem:[%s203 + $0x28] sm:$0xff]
        %v247 = vld [vmem:[%s203 + $0x30] sm:$0xff]
        %v248 = vld [vmem:[%s203 + $0x38] sm:$0xff]
        %v249 = vld [vmem:[%s203 + $0x40] sm:$0xf]
        %v250 = vld [vmem:[%s203 + $0x48] sm:$0xf]
        %vm251 = vcmask 293888
        %v253 = vsel %vm251, %v240, 0
        %vm255 = vcmask 1043456
        %v257 = vsel %vm255, %v249, 0
        %v260 = vsel %vm255, %v250, 0
        %262 = vmatprep.subr.mxu0 0.0
        %263 = vmatpush1.msra.mxu0 0.0
        %264 = vmatprep.subr.mxu0 0.0
        %265 = vmatpush1.msra.mxu0 0.0
        %266 = vmatprep.subr.mxu0 0.0
        %267 = vmatpush1.msra.mxu0 0.0
        %268 = vmatprep.subr.mxu0 0.0
        %269 = vmatpush1.msra.mxu0 0.0
        %270 = vmatprep.subr.mxu0 0.0
        %271 = vmatpush1.msra.mxu0 0.0
        %272 = vmatprep.subr.mxu0 0.0
        %273 = vmatpush1.msra.mxu0 0.0
        %274 = vmatprep.subr.mxu0 0.0
        %275 = vmatpush1.msra.mxu0 0.0
        %276 = vmatprep.subr.mxu0 0.0
        %277 = vmatpush1.msra.mxu0 0.0
        %278 = vmatprep.subr.mxu0 0.0
        %279 = vmatpush1.msra.mxu0 0.0
        %280 = vmatprep.subr.mxu0 0.0
        %281 = vmatpush1.msra.mxu0 0.0
        %282 = vmatprep.subr.mxu0 0.0
        %283 = vmatpush1.msra.mxu0 0.0
        %284 = vmatprep.subr.mxu0 %v260
        %285 = vmatpush1.msra.mxu0 %v257
        %286 = vmatprep.subr.mxu0 %v248
        %287 = vmatpush1.msra.mxu0 %v247
        %288 = vmatprep.subr.mxu0 %v246
        %289 = vmatpush1.msra.mxu0 %v245
        %290 = vmatprep.subr.mxu0 %v244
        %291 = vmatpush1.msra.mxu0 %v243
        %292 = vmatprep.subr.mxu0 %v242
        %293 = vmatpush1.msra.mxu0 %v241
        %294 = vmatprep.subr.mxu0 0.0
        %295 = vmatpush2.msra.mxu0 0.0
        %296 = vmatprep.subr.mxu0 0.0
        %297 = vmatpush2.msra.mxu0 0.0
        %298 = vmatprep.subr.mxu0 0.0
        %299 = vmatpush2.msra.mxu0 0.0
        %300 = vmatprep.subr.mxu0 0.0
        %301 = vmatpush2.msra.mxu0 0.0
        %302 = vmatprep.subr.mxu0 0.0
        %303 = vmatpush2.msra.mxu0 0.0
        %304 = vmatprep.subr.mxu0 0.0
        %305 = vmatpush2.msra.mxu0 0.0
        %306 = vmatprep.subr.mxu0 0.0
        %307 = vmatpush2.msra.mxu0 0.0
        %308 = vmatprep.subr.mxu0 0.0
        %309 = vmatpush2.msra.mxu0 0.0
        %310 = vmatprep.subr.mxu0 0.0
        %311 = vmatpush2.msra.mxu0 0.0
        %312 = vmatprep.subr.mxu0 0.0
        %313 = vmatpush2.msra.mxu0 0.0
        %314 = vmatprep.subr.mxu0 0.0
        %315 = vmatpush2.msra.mxu0 0.0
        %316 = vmatprep.subr.mxu0 0.0
        %317 = vmatpush2.msra.mxu0 0.0
        %318 = vmatprep.subr.mxu0 0.0
        %319 = vmatpush2.msra.mxu0 0.0
        %320 = vmatprep.subr.mxu0 0.0
        %321 = vmatpush2.msra.mxu0 0.0
        %322 = vmatprep.subr.mxu0 0.0
        %323 = vmatpush2.msra.mxu0 0.0
        %324 = vmatprep.subr.mxu0 0.0
        %325 = vmatpush2.msra.mxu0 0.0
        %326 = vmatprep.mubr.f32.mxu0 0.0
        %327 = vmatmul.mubr.f32.gmra.mxu0 %v253
        %v328 = vpop.f32.mrf.mxu0
        %v329 = vadd.f32 0.0, %v328
        %v330 = vpop.f32.mrf.mxu0
        %v331 = vadd.f32 0.0, %v330
        %332 = vdwg.mxu0
        %333 = vst [vmem:[%s231] sm:$0xff] %v329
        %334 = vst [vmem:[%s231 + $0x8] sm:$0xff] %v331
        %v335 = vld [vmem:[%s3] sm:$0xff]
        %v336 = vadd.f32 %v329, %v331
        %337 = vadd.xlane.f32.xlu0 %v336
        %v338 = vpop.xlane.xlu0 %337
        %v339 = vadd.f32 %v335, %v338
        %vm340 = vcmask 7168
        %341 = vst.msk [vmem:[%s3] sm:$0xff] %vm340, %v339
        %v342 = vld [vmem:[%s4] sm:$0xff]
        %v343 = vmul.f32 %v329, %v329
        %v344 = vmul.f32 %v331, %v331
        %v345 = vadd.f32 %v343, %v344
        %346 = vadd.xlane.f32.xlu0 %v345
        %v347 = vpop.xlane.xlu0 %346
        %v348 = vadd.f32 %v342, %v347
        %349 = vst.msk [vmem:[%s4] sm:$0xff] %vm340, %v348
        %s350 = smul.u32 2, %s16
        %p351 = scmp.lt.s32.totalorder %s350, 3
        %s352 = scalar_select %p351, %s350, 3
        %s353 = smul.addr %s352, 8
        %s354 = scalar_lea.vmem %s2, %s353
        // Predicated region
        $region56: #{conv2d_batchnorm_relu.2} parent=46 // pred_check
          %p355 = pneg %p81
        $region57: #{conv2d_batchnorm_relu.2} parent=46 // pred_check_branch
          %357 = sbr.rel (%p355) target = $region59
        $region58: #{conv2d_batchnorm_relu.2} parent=46 // pred_region
          %s358 = smul.u32 2, %s16
        $region59: #{conv2d_batchnorm_relu.2} parent=46 // pred_fallthru
          _
        // Predicated region
        $region60: #{conv2d_batchnorm_relu.2} parent=46 // pred_check
          %p359 = pneg %p102
        $region61: #{conv2d_batchnorm_relu.2} parent=46 // pred_check_branch
          %361 = sbr.rel (%p359) target = $region63
        $region62: #{conv2d_batchnorm_relu.2} parent=46 // pred_region
          _
        $region63: #{conv2d_batchnorm_relu.2} parent=46 // pred_fallthru
          _
        // Predicated region
        $region64: #{conv2d_batchnorm_relu.2} parent=46 // pred_check
          %p362 = pneg %p123
        $region65: #{conv2d_batchnorm_relu.2} parent=46 // pred_check_branch
          %364 = sbr.rel (%p362) target = $region67
        $region66: #{conv2d_batchnorm_relu.2} parent=46 // pred_region
          _
        $region67: #{conv2d_batchnorm_relu.2} parent=46 // pred_fallthru
          _
        // Predicated region
        $region68: #{conv2d_batchnorm_relu.2} parent=46 // pred_check
          %p365 = pneg %p102
        $region69: #{conv2d_batchnorm_relu.2} parent=46 // pred_check_branch
          %367 = sbr.rel (%p365) target = $region71
        $region70: #{conv2d_batchnorm_relu.2} parent=46 // pred_region
          _
        $region71: #{conv2d_batchnorm_relu.2} parent=46 // pred_fallthru
          _
        // Predicated region
        $region72: #{conv2d_batchnorm_relu.2} parent=46 // pred_check
          %p368 = pneg %p123
        $region73: #{conv2d_batchnorm_relu.2} parent=46 // pred_check_branch
          %370 = sbr.rel (%p368) target = $region75
        $region74: #{conv2d_batchnorm_relu.2} parent=46 // pred_region
          _
        $region75: #{conv2d_batchnorm_relu.2} parent=46 // pred_fallthru
          _
      $region47: #{conv2d_batchnorm_relu.2} parent=5 // pred_fallthru
        _
      %p371 = scmp.le.s32.totalorder 2, %s11
      // Predicated region
      $region76: #{conv2d_batchnorm_relu.2} parent=5 // pred_check
        %p372 = pneg %p371
      $region77: #{conv2d_batchnorm_relu.2} parent=5 // pred_check_branch
        %374 = sbr.rel (%p372) target = $region79
      $region78: #{conv2d_batchnorm_relu.2} parent=5 // pred_region
        %s375 = ssub.s32 %s11, 2
        // Predicated region
        $region80: #{conv2d_batchnorm_relu.2} parent=78 // pred_check
          %p376 = pneg %p87
        $region81: #{conv2d_batchnorm_relu.2} parent=78 // pred_check_branch
          %378 = sbr.rel (%p376) target = $region83
        $region82: #{conv2d_batchnorm_relu.2} parent=78 // pred_region
          %s379 = smul.u32 2, %s17
          %p380 = scmp.lt.s32.totalorder %s379, 3
          %s381 = scalar_select %p380, %s379, 3
          %s382 = smul.addr %s381, 8
          %s383 = scalar_lea.vmem %s2, %s382
        $region83: #{conv2d_batchnorm_relu.2} parent=78 // pred_fallthru
          _
      $region79: #{conv2d_batchnorm_relu.2} parent=5 // pred_fallthru
        _
    $region6: #{conv2d_batchnorm_relu.2} parent=1 // loop_footer
      %s15 = sadd.s32 1, %s11
    $region7: #{conv2d_batchnorm_relu.2} parent=1 // loop_footer_branch
      %10 = sbr.rel target = $region3
    $region8: #{conv2d_batchnorm_relu.2} parent=1 // loop_exit
      _

</llo_original>
